<compile_context>
chip_gen: v6e
topology: v6e:2x2x1
jax: 0.10.0
libtpu: 0.0.40
codegen_flags: <defaults>
</compile_context>

<pallas_src>
import functools

import jax
import jax.numpy as jnp
from jax.experimental import pallas as pl
from jax.experimental.pallas import tpu as pltpu


def cnp_kernel(
    # ---- packed parameters (grid-invariant) ----
    enc1W_ref,   # (Dx+Dy, H)  encoder L1 weight, y_mlp folded in
    wHR_ref,     # (2H, R)     rows [:H] = encoder L2 (e2W), rows [H:] = aggregator L2 (a2W)
    wRH_ref,     # (2R, H)     rows [:R] = aggregator L1 (a1W), rows [R:] = decoder L1 rep part (d1Wr)
    d1Wx_ref,    # (Dx, H)     decoder L1 weight, query_x part
    d2W_ref,     # (H, d_out)  decoder L2 weight
    bias_ref,    # (6, Hmax)   rows = [be, e2b, a1b, a2b, d1b, d2b], zero padded
    # ---- per-block task data (TB tasks, task-major rows) ----
    sxy_ref,     # (TB*N, Dx+Dy)  [support_x | support_y]
    qx_ref,      # (TB*Q, Dx)
    # ---- output ----
    out_ref,     # (TB*Q, d_out)  columns = [mu, sigma]
    *, num_ctx, num_query,
):
    f32 = jnp.float32
    H = enc1W_ref.shape[1]
    R = wHR_ref.shape[1]
    d_out = d2W_ref.shape[1]
    N, Q = num_ctx, num_query
    TB = sxy_ref.shape[0] // N

    be = bias_ref[0:1, :H]
    e2b = bias_ref[1:2, :R]
    a1b = bias_ref[2:3, :H]
    a2b = bias_ref[3:4, :R]
    d1b = bias_ref[4:5, :H]
    d2b = bias_ref[5:6, :d_out]

    sxy = sxy_ref[...]
    qx = qx_ref[...]

    # ---------------- Encoder ----------------
    # relu((sx + y_mlp(sy)) @ e1W + e1b) == relu([sx|sy] @ [e1W; yW@e1W] + (yb@e1W + e1b))
    h = jnp.maximum(
        jnp.dot(sxy, enc1W_ref[...], preferred_element_type=f32) + be, 0.0)
    reps = jnp.dot(h, wHR_ref[:H, :], preferred_element_type=f32) + e2b        # (TB*N, R)

    # ---------------- Aggregator ----------------
    # Per-task mean over the N context rows as a matmul against a constant
    # (TB, TB*N) block-averaging matrix (reduction on MXU, not XLU/VALU).
    r = jax.lax.broadcasted_iota(jnp.int32, (TB, TB * N), 0)
    c = jax.lax.broadcasted_iota(jnp.int32, (TB, TB * N), 1)
    avg = jnp.where((c >= r * N) & (c < (r + 1) * N), 1.0 / N, 0.0)
    mean = jnp.dot(avg, reps, preferred_element_type=f32)                      # (TB, R)

    a = jnp.maximum(
        jnp.dot(mean, wRH_ref[:R, :], preferred_element_type=f32) + a1b, 0.0)
    rep = jnp.dot(a, wHR_ref[H:, :], preferred_element_type=f32) + a2b         # (TB, R)

    # ---------------- Decoder ----------------
    # concat([rep_tiled, qx], -1) @ d1W == rep @ d1Wr + qx @ d1Wx; the per-task
    # -> per-query replication of rep @ d1Wr is another constant 0/1 matmul.
    d_rep = jnp.dot(rep, wRH_ref[R:, :], preferred_element_type=f32)           # (TB, H)
    rr = jax.lax.broadcasted_iota(jnp.int32, (TB * Q, TB), 0)
    cc = jax.lax.broadcasted_iota(jnp.int32, (TB * Q, TB), 1)
    expand = jnp.where((rr >= cc * Q) & (rr < (cc + 1) * Q), 1.0, 0.0)         # (TB*Q, TB)
    d = jnp.maximum(
        jnp.dot(qx, d1Wx_ref[...], preferred_element_type=f32) + d1b
        + jnp.dot(expand, d_rep, preferred_element_type=f32), 0.0)             # (TB*Q, H)
    out = jax.nn.sigmoid(
        jnp.dot(d, d2W_ref[...], preferred_element_type=f32) + d2b)            # (TB*Q, d_out)

    # mu = 0.001 + out[:, 0]; sigma = 0.001 + exp(out[:, 1])  (d_out == 2)
    cols = jax.lax.broadcasted_iota(jnp.int32, out.shape, 1)
    out_ref[...] = 0.001 + jnp.where(cols == 0, out, jnp.exp(out))


def _pick_tb(B, N, Q, Dxy, Dx, d_out, H, R, budget_bytes=6 << 20):
    """Largest task block whose rough per-step VMEM footprint fits `budget_bytes`."""
    def per_step_bytes(tb):
        data = 2 * 4 * (tb * N * Dxy + tb * Q * Dx + tb * Q * d_out)   # double-buffered blocks
        interm = 4 * (tb * N * (H + R) + tb * Q * (H + d_out) + tb * (2 * H + 2 * R))
        return data + interm
    if per_step_bytes(B) <= budget_bytes:
        return B                                      # whole batch in one grid step
    return max(8, min(B, budget_bytes // per_step_bytes(1) // 8 * 8))


def cnp_forward(params, support_x, support_y, query_x, *, tb=None):
    """params: list of 2-D float32 arrays in canonical (PyTorch) order."""
    # TODO(synk): the PyTorch branch `len(support_x) == 0` (zero representation)
    # is Python-level control flow; this kernel implements the non-empty case.
    (yW, yb, e1W, e1b, e2W, e2b, a1W, a1b, a2W, a2b,
     d1Wr, d1Wx, d1b, d2W, d2b) = params

    B, N, Dx = support_x.shape
    _, _, Dy = support_y.shape
    _, Q, _ = query_x.shape
    H = e1W.shape[1]
    R = e2W.shape[1]
    d_out = d2W.shape[1]
    if d_out != 2:
        raise ValueError("decoder output must be (mu, log_sigma), i.e. d_out == 2")
    # Packed-weight scheme assumes matching hidden widths (as in make_params).
    assert a1W.shape[1] == H and d1Wr.shape[1] == H and a2W.shape[1] == R

    # ---- host-side (one-off) parameter packing: 14 tensors -> 6 refs ----
    We = yW @ e1W                                    # fold y_mlp into encoder L1
    be = yb @ e1W + e1b
    enc1W = jnp.concatenate([e1W, We], axis=0)       # (Dx+Dy, H)
    wHR = jnp.concatenate([e2W, a2W], axis=0)        # (2H, R)
    wRH = jnp.concatenate([a1W, d1Wr], axis=0)       # (2R, H)
    Hmax = max(H, R, d_out)
    biases = jnp.concatenate(
        [jnp.pad(b, ((0, 0), (0, Hmax - b.shape[1])))
         for b in (be, e2b, a1b, a2b, d1b, d2b)], axis=0)   # (6, Hmax)
    kparams = [enc1W, wHR, wRH, d1Wx, d2W, biases]

    # ---- task blocking (TB tasks per grid step) ----
    Dxy = Dx + Dy
    if tb is None:
        tb = _pick_tb(B, N, Q, Dxy, Dx, d_out, H, R)
    tb = max(1, min(tb, B))
    if tb < B:
        tb = max(8, (tb // 8) * 8)        # keep sub-batch blocks (8,128)-friendly
    grid_b = pl.cdiv(B, tb)
    B_pad = grid_b * tb

    # ---- host-side data packing: flatten to 2-D, task-major rows ----
    sxy = jnp.concatenate([support_x, support_y], axis=-1)   # (B, N, Dx+Dy)
    qx = query_x
    if B_pad != B:
        pad3 = ((0, B_pad - B), (0, 0), (0, 0))
        sxy = jnp.pad(sxy, pad3)
        qx = jnp.pad(qx, pad3)
    sxy = sxy.reshape(B_pad * N, Dxy)
    qx = qx.reshape(B_pad * Q, Dx)

    param_specs = [pl.BlockSpec(p.shape, lambda b: (0, 0)) for p in kparams]
    data_specs = [
        pl.BlockSpec((tb * N, Dxy), lambda b: (b, 0)),   # [support_x | support_y]
        pl.BlockSpec((tb * Q, Dx), lambda b: (b, 0)),    # query_x
    ]
    out_spec = pl.BlockSpec((tb * Q, d_out), lambda b: (b, 0))

    kernel = functools.partial(cnp_kernel, num_ctx=N, num_query=Q)
    packed = pl.pallas_call(
        kernel,
        out_shape=jax.ShapeDtypeStruct((B_pad * Q, d_out), jnp.float32),
        grid_spec=pltpu.PrefetchScalarGridSpec(
            num_scalar_prefetch=0,
            grid=(grid_b,),
            in_specs=param_specs + data_specs,
            out_specs=out_spec,
        ),
        # Per-step footprint is capped well below the 16/32 MiB scoped-VMEM
        # defaults (and v7x's 64 MiB physical), so no vmem_limit_bytes needed.
        compiler_params=pltpu.CompilerParams(
            dimension_semantics=("parallel",)),
    )(*kparams, sxy, qx)

    out = packed.reshape(B_pad, Q, d_out)[:B]
    return out[..., 0:1], out[..., 1:2]


def cnp_reference(params, support_x, support_y, query_x):
    """Pure-JAX reference of the PyTorch forward for verification."""
    (yW, yb, e1W, e1b, e2W, e2b, a1W, a1b, a2W, a2b,
     d1Wr, d1Wx, d1b, d2W, d2b) = params
    y_emb = support_y @ yW + yb
    x = support_x + y_emb
    h = jax.nn.relu(x @ e1W + e1b)
    reps = h @ e2W + e2b
    mean = reps.mean(axis=-2)                      # (B, R)
    a = jax.nn.relu(mean @ a1W + a1b)
    rep = a @ a2W + a2b                            # (B, R)
    d1W = jnp.concatenate([d1Wr, d1Wx], axis=0)
    rep_t = jnp.broadcast_to(rep[:, None, :], query_x.shape[:2] + (rep.shape[-1],))
    dec_in = jnp.concatenate([rep_t, query_x], axis=-1)
    d = jax.nn.relu(dec_in @ d1W + d1b)
    out = jax.nn.sigmoid(d @ d2W + d2b)
    mu = 0.001 + out[..., 0:1]
    sigma = 0.001 + jnp.exp(out[..., 1:2])
    return mu, sigma


def make_params(key, x_dims, y_dims, hidden, rep, d_out):
    """Deterministic synthetic parameters. Biases kept 2-D (1, out) for TPU layout."""
    shapes = [
        ("yW", (y_dims, x_dims)), ("yb", (1, x_dims)),
        ("e1W", (x_dims, hidden)), ("e1b", (1, hidden)),
        ("e2W", (hidden, rep)), ("e2b", (1, rep)),
        ("a1W", (rep, hidden)), ("a1b", (1, hidden)),
        ("a2W", (hidden, rep)), ("a2b", (1, rep)),
        ("d1Wr", (rep, hidden)), ("d1Wx", (x_dims, hidden)), ("d1b", (1, hidden)),
        ("d2W", (hidden, d_out)), ("d2b", (1, d_out)),
    ]
    params = []
    for i, (_, s) in enumerate(shapes):
        k = jax.random.fold_in(key, i)
        fan_in = s[0] if s[0] > 1 else s[1]
        params.append(
            jax.random.uniform(k, s, jnp.float32,
                               -1.0 / jnp.sqrt(fan_in), 1.0 / jnp.sqrt(fan_in)))
    return params


if __name__ == "__main__":
    # Small shapes consistent with the module. Default blocking puts the whole
    # batch in a single grid step (TB = B, grid=(1,)).
    B, N, Q = 8, 8, 8          # task batch, context set size, query set size
    x_dims, y_dims = 4, 2      # feature dims
    hidden, rep, d_out = 32, 32, 2

    key = jax.random.PRNGKey(0)
    kp, kx, ky, kq = jax.random.split(key, 4)

    params = make_params(kp, x_dims, y_dims, hidden, rep, d_out)
    support_x = jax.random.normal(kx, (B, N, x_dims), jnp.float32)
    support_y = jax.random.normal(ky, (B, N, y_dims), jnp.float32)
    query_x = jax.random.normal(kq, (B, Q, x_dims), jnp.float32)

    mu, sigma = cnp_forward(params, support_x, support_y, query_x)
    jax.block_until_ready((mu, sigma))

    mu_ref, sigma_ref = cnp_reference(params, support_x, support_y, query_x)
    assert mu.shape == (B, Q, 1) and sigma.shape == (B, Q, 1)
    assert jnp.allclose(mu, mu_ref, atol=1e-5, rtol=1e-5)
    assert jnp.allclose(sigma, sigma_ref, atol=1e-5, rtol=1e-5)

    print("KERNEL_OK")
</pallas_src>

<mosaic_0001>
module attributes {stable_mosaic.version = 11 : i64} {
  func.func @cnp_kernel(%arg0: i32, %arg1: memref<6x32xf32, #tpu.memory_space<vmem>>, %arg2: memref<64x32xf32, #tpu.memory_space<vmem>>, %arg3: memref<64x32xf32, #tpu.memory_space<vmem>>, %arg4: memref<4x32xf32, #tpu.memory_space<vmem>>, %arg5: memref<32x2xf32, #tpu.memory_space<vmem>>, %arg6: memref<6x32xf32, #tpu.memory_space<vmem>>, %arg7: memref<64x6xf32, #tpu.memory_space<vmem>>, %arg8: memref<64x4xf32, #tpu.memory_space<vmem>>, %arg9: memref<64x2xf32, #tpu.memory_space<vmem>>) attributes {dimension_semantics = [#tpu.dimension_semantics<parallel>], iteration_bounds = array<i64: 1>, scalar_prefetch = 0 : i64, scratch_operands = 0 : i64, tpu.core_type = #tpu.core_type<tc>, window_params = [{pipeline_mode = #tpu.pipeline_mode<synchronous>, transform_indices = @transform_0, window_bounds = array<i64: 6, 32>}, {pipeline_mode = #tpu.pipeline_mode<synchronous>, transform_indices = @transform_1, window_bounds = array<i64: 64, 32>}, {pipeline_mode = #tpu.pipeline_mode<synchronous>, transform_indices = @transform_2, window_bounds = array<i64: 64, 32>}, {pipeline_mode = #tpu.pipeline_mode<synchronous>, transform_indices = @transform_3, window_bounds = array<i64: 4, 32>}, {pipeline_mode = #tpu.pipeline_mode<synchronous>, transform_indices = @transform_4, window_bounds = array<i64: 32, 2>}, {pipeline_mode = #tpu.pipeline_mode<synchronous>, transform_indices = @transform_5, window_bounds = array<i64: 6, 32>}, {transform_indices = @transform_6, window_bounds = array<i64: 64, 6>}, {transform_indices = @transform_7, window_bounds = array<i64: 64, 4>}, {transform_indices = @transform_8, window_bounds = array<i64: 64, 2>}]} {
    %c0 = arith.constant 0 : index
    %c0_0 = arith.constant 0 : index
    %0 = vector.load %arg6[%c0, %c0_0] : memref<6x32xf32, #tpu.memory_space<vmem>>, vector<1x32xf32>
    %c1 = arith.constant 1 : index
    %c0_1 = arith.constant 0 : index
    %1 = vector.load %arg6[%c1, %c0_1] : memref<6x32xf32, #tpu.memory_space<vmem>>, vector<1x32xf32>
    %c2 = arith.constant 2 : index
    %c0_2 = arith.constant 0 : index
    %2 = vector.load %arg6[%c2, %c0_2] : memref<6x32xf32, #tpu.memory_space<vmem>>, vector<1x32xf32>
    %c3 = arith.constant 3 : index
    %c0_3 = arith.constant 0 : index
    %3 = vector.load %arg6[%c3, %c0_3] : memref<6x32xf32, #tpu.memory_space<vmem>>, vector<1x32xf32>
    %c4 = arith.constant 4 : index
    %c0_4 = arith.constant 0 : index
    %4 = vector.load %arg6[%c4, %c0_4] : memref<6x32xf32, #tpu.memory_space<vmem>>, vector<1x32xf32>
    %c5 = arith.constant 5 : index
    %c0_5 = arith.constant 0 : index
    %5 = vector.load %arg6[%c5, %c0_5] : memref<6x32xf32, #tpu.memory_space<vmem>>, vector<1x2xf32>
    %c0_6 = arith.constant 0 : index
    %c0_7 = arith.constant 0 : index
    %6 = vector.load %arg7[%c0_6, %c0_7] : memref<64x6xf32, #tpu.memory_space<vmem>>, vector<64x6xf32>
    %c0_8 = arith.constant 0 : index
    %c0_9 = arith.constant 0 : index
    %7 = vector.load %arg8[%c0_8, %c0_9] : memref<64x4xf32, #tpu.memory_space<vmem>>, vector<64x4xf32>
    %c0_10 = arith.constant 0 : index
    %c0_11 = arith.constant 0 : index
    %8 = vector.load %arg1[%c0_10, %c0_11] : memref<6x32xf32, #tpu.memory_space<vmem>>, vector<6x32xf32>
    %cst = arith.constant dense<0.000000e+00> : vector<64x32xf32>
    %9 = tpu.matmul %6, %8, %cst {dimension_numbers = #tpu.dot_dimension_numbers<[1], [0], [0], [1], [0, 0, 1, 1], [], []>} : vector<64x6xf32>, vector<6x32xf32>, vector<64x32xf32> -> vector<64x32xf32>
    %10 = vector.broadcast %0 : vector<1x32xf32> to vector<64x32xf32>
    %11 = arith.addf %9, %10 : vector<64x32xf32>
    %cst_12 = arith.constant 0.000000e+00 : f32
    %12 = vector.broadcast %cst_12 : f32 to vector<64x32xf32>
    %13 = arith.maximumf %11, %12 : vector<64x32xf32>
    %c0_13 = arith.constant 0 : index
    %c0_14 = arith.constant 0 : index
    %14 = vector.load %arg2[%c0_13, %c0_14] : memref<64x32xf32, #tpu.memory_space<vmem>>, vector<32x32xf32>
    %cst_15 = arith.constant dense<0.000000e+00> : vector<64x32xf32>
    %15 = tpu.matmul %13, %14, %cst_15 {dimension_numbers = #tpu.dot_dimension_numbers<[1], [0], [0], [1], [0, 0, 1, 1], [], []>} : vector<64x32xf32>, vector<32x32xf32>, vector<64x32xf32> -> vector<64x32xf32>
    %16 = vector.broadcast %1 : vector<1x32xf32> to vector<64x32xf32>
    %17 = arith.addf %15, %16 : vector<64x32xf32>
    %18 = tpu.iota {dimensions = array<i32: 0>} : vector<8x64xi32>
    %19 = tpu.iota {dimensions = array<i32: 1>} : vector<8x64xi32>
    %c8_i32 = arith.constant 8 : i32
    %20 = vector.broadcast %c8_i32 : i32 to vector<8x64xi32>
    %21 = arith.muli %18, %20 : vector<8x64xi32>
    %22 = arith.cmpi sge, %19, %21 : vector<8x64xi32>
    %c1_i32 = arith.constant 1 : i32
    %23 = vector.broadcast %c1_i32 : i32 to vector<8x64xi32>
    %24 = arith.addi %18, %23 : vector<8x64xi32>
    %c8_i32_16 = arith.constant 8 : i32
    %25 = vector.broadcast %c8_i32_16 : i32 to vector<8x64xi32>
    %26 = arith.muli %24, %25 : vector<8x64xi32>
    %27 = arith.cmpi slt, %19, %26 : vector<8x64xi32>
    %28 = arith.andi %22, %27 : vector<8x64xi1>
    %cst_17 = arith.constant 1.250000e-01 : f32
    %cst_18 = arith.constant 0.000000e+00 : f32
    %29 = vector.broadcast %cst_17 : f32 to vector<8x64xf32>
    %30 = vector.broadcast %cst_18 : f32 to vector<8x64xf32>
    %31 = arith.select %28, %29, %30 : vector<8x64xi1>, vector<8x64xf32>
    %cst_19 = arith.constant dense<0.000000e+00> : vector<8x32xf32>
    %32 = tpu.matmul %31, %17, %cst_19 {dimension_numbers = #tpu.dot_dimension_numbers<[1], [0], [0], [1], [0, 0, 1, 1], [], []>} : vector<8x64xf32>, vector<64x32xf32>, vector<8x32xf32> -> vector<8x32xf32>
    %c0_20 = arith.constant 0 : index
    %c0_21 = arith.constant 0 : index
    %33 = vector.load %arg3[%c0_20, %c0_21] : memref<64x32xf32, #tpu.memory_space<vmem>>, vector<32x32xf32>
    %cst_22 = arith.constant dense<0.000000e+00> : vector<8x32xf32>
    %34 = tpu.matmul %32, %33, %cst_22 {dimension_numbers = #tpu.dot_dimension_numbers<[1], [0], [0], [1], [0, 0, 1, 1], [], []>} : vector<8x32xf32>, vector<32x32xf32>, vector<8x32xf32> -> vector<8x32xf32>
    %35 = vector.broadcast %2 : vector<1x32xf32> to vector<8x32xf32>
    %36 = arith.addf %34, %35 : vector<8x32xf32>
    %cst_23 = arith.constant 0.000000e+00 : f32
    %37 = vector.broadcast %cst_23 : f32 to vector<8x32xf32>
    %38 = arith.maximumf %36, %37 : vector<8x32xf32>
    %c32 = arith.constant 32 : index
    %c0_24 = arith.constant 0 : index
    %39 = vector.load %arg2[%c32, %c0_24] : memref<64x32xf32, #tpu.memory_space<vmem>>, vector<32x32xf32>
    %cst_25 = arith.constant dense<0.000000e+00> : vector<8x32xf32>
    %40 = tpu.matmul %38, %39, %cst_25 {dimension_numbers = #tpu.dot_dimension_numbers<[1], [0], [0], [1], [0, 0, 1, 1], [], []>} : vector<8x32xf32>, vector<32x32xf32>, vector<8x32xf32> -> vector<8x32xf32>
    %41 = vector.broadcast %3 : vector<1x32xf32> to vector<8x32xf32>
    %42 = arith.addf %40, %41 : vector<8x32xf32>
    %c32_26 = arith.constant 32 : index
    %c0_27 = arith.constant 0 : index
    %43 = vector.load %arg3[%c32_26, %c0_27] : memref<64x32xf32, #tpu.memory_space<vmem>>, vector<32x32xf32>
    %cst_28 = arith.constant dense<0.000000e+00> : vector<8x32xf32>
    %44 = tpu.matmul %42, %43, %cst_28 {dimension_numbers = #tpu.dot_dimension_numbers<[1], [0], [0], [1], [0, 0, 1, 1], [], []>} : vector<8x32xf32>, vector<32x32xf32>, vector<8x32xf32> -> vector<8x32xf32>
    %45 = tpu.iota {dimensions = array<i32: 0>} : vector<64x8xi32>
    %46 = tpu.iota {dimensions = array<i32: 1>} : vector<64x8xi32>
    %c8_i32_29 = arith.constant 8 : i32
    %47 = vector.broadcast %c8_i32_29 : i32 to vector<64x8xi32>
    %48 = arith.muli %46, %47 : vector<64x8xi32>
    %49 = arith.cmpi sge, %45, %48 : vector<64x8xi32>
    %c1_i32_30 = arith.constant 1 : i32
    %50 = vector.broadcast %c1_i32_30 : i32 to vector<64x8xi32>
    %51 = arith.addi %46, %50 : vector<64x8xi32>
    %c8_i32_31 = arith.constant 8 : i32
    %52 = vector.broadcast %c8_i32_31 : i32 to vector<64x8xi32>
    %53 = arith.muli %51, %52 : vector<64x8xi32>
    %54 = arith.cmpi slt, %45, %53 : vector<64x8xi32>
    %55 = arith.andi %49, %54 : vector<64x8xi1>
    %cst_32 = arith.constant 1.000000e+00 : f32
    %cst_33 = arith.constant 0.000000e+00 : f32
    %56 = vector.broadcast %cst_32 : f32 to vector<64x8xf32>
    %57 = vector.broadcast %cst_33 : f32 to vector<64x8xf32>
    %58 = arith.select %55, %56, %57 : vector<64x8xi1>, vector<64x8xf32>
    %c0_34 = arith.constant 0 : index
    %c0_35 = arith.constant 0 : index
    %59 = vector.load %arg4[%c0_34, %c0_35] : memref<4x32xf32, #tpu.memory_space<vmem>>, vector<4x32xf32>
    %cst_36 = arith.constant dense<0.000000e+00> : vector<64x32xf32>
    %60 = tpu.matmul %7, %59, %cst_36 {dimension_numbers = #tpu.dot_dimension_numbers<[1], [0], [0], [1], [0, 0, 1, 1], [], []>} : vector<64x4xf32>, vector<4x32xf32>, vector<64x32xf32> -> vector<64x32xf32>
    %61 = vector.broadcast %4 : vector<1x32xf32> to vector<64x32xf32>
    %62 = arith.addf %60, %61 : vector<64x32xf32>
    %cst_37 = arith.constant dense<0.000000e+00> : vector<64x32xf32>
    %63 = tpu.matmul %58, %44, %cst_37 {dimension_numbers = #tpu.dot_dimension_numbers<[1], [0], [0], [1], [0, 0, 1, 1], [], []>} : vector<64x8xf32>, vector<8x32xf32>, vector<64x32xf32> -> vector<64x32xf32>
    %64 = arith.addf %62, %63 : vector<64x32xf32>
    %cst_38 = arith.constant 0.000000e+00 : f32
    %65 = vector.broadcast %cst_38 : f32 to vector<64x32xf32>
    %66 = arith.maximumf %64, %65 : vector<64x32xf32>
    %c0_39 = arith.constant 0 : index
    %c0_40 = arith.constant 0 : index
    %67 = vector.load %arg5[%c0_39, %c0_40] : memref<32x2xf32, #tpu.memory_space<vmem>>, vector<32x2xf32>
    %cst_41 = arith.constant dense<0.000000e+00> : vector<64x2xf32>
    %68 = tpu.matmul %66, %67, %cst_41 {dimension_numbers = #tpu.dot_dimension_numbers<[1], [0], [0], [1], [0, 0, 1, 1], [], []>} : vector<64x32xf32>, vector<32x2xf32>, vector<64x2xf32> -> vector<64x2xf32>
    %69 = vector.broadcast %5 : vector<1x2xf32> to vector<64x2xf32>
    %70 = arith.addf %68, %69 : vector<64x2xf32>
    %71 = arith.negf %70 : vector<64x2xf32>
    %72 = math.exp %71 : vector<64x2xf32>
    %cst_42 = arith.constant 1.000000e+00 : f32
    %73 = vector.broadcast %cst_42 : f32 to vector<64x2xf32>
    %74 = arith.addf %73, %72 : vector<64x2xf32>
    %75 = arith.divf %73, %74 : vector<64x2xf32>
    %76 = tpu.iota {dimensions = array<i32: 1>} : vector<64x2xi32>
    %c0_i32 = arith.constant 0 : i32
    %77 = vector.broadcast %c0_i32 : i32 to vector<64x2xi32>
    %78 = arith.cmpi eq, %76, %77 : vector<64x2xi32>
    %79 = math.exp %75 : vector<64x2xf32>
    %80 = arith.select %78, %75, %79 : vector<64x2xi1>, vector<64x2xf32>
    %cst_43 = arith.constant 1.000000e-03 : f32
    %81 = vector.broadcast %cst_43 : f32 to vector<64x2xf32>
    %82 = arith.addf %81, %80 : vector<64x2xf32>
    %c0_44 = arith.constant 0 : index
    %c0_45 = arith.constant 0 : index
    %83 = vector.load %arg9[%c0_44, %c0_45] : memref<64x2xf32, #tpu.memory_space<vmem>>, vector<64x2xf32>
    tpu.vector_store %arg9[%c0_44, %c0_45], %82 {strides = array<i32>} : memref<64x2xf32, #tpu.memory_space<vmem>>, vector<64x2xf32>,
    return
  }
  func.func @transform_0(%arg0: i32) -> (i32, i32) {
    %c0_i32 = arith.constant 0 : i32
    %c0_i32_0 = arith.constant 0 : i32
    %c0_i32_1 = arith.constant 0 : i32
    return %c0_i32, %c0_i32_0 : i32, i32
  }
  func.func @transform_1(%arg0: i32) -> (i32, i32) {
    %c0_i32 = arith.constant 0 : i32
    %c0_i32_0 = arith.constant 0 : i32
    %c0_i32_1 = arith.constant 0 : i32
    return %c0_i32, %c0_i32_0 : i32, i32
  }
  func.func @transform_2(%arg0: i32) -> (i32, i32) {
    %c0_i32 = arith.constant 0 : i32
    %c0_i32_0 = arith.constant 0 : i32
    %c0_i32_1 = arith.constant 0 : i32
    return %c0_i32, %c0_i32_0 : i32, i32
  }
  func.func @transform_3(%arg0: i32) -> (i32, i32) {
    %c0_i32 = arith.constant 0 : i32
    %c0_i32_0 = arith.constant 0 : i32
    %c0_i32_1 = arith.constant 0 : i32
    return %c0_i32, %c0_i32_0 : i32, i32
  }
  func.func @transform_4(%arg0: i32) -> (i32, i32) {
    %c0_i32 = arith.constant 0 : i32
    %c0_i32_0 = arith.constant 0 : i32
    %c0_i32_1 = arith.constant 0 : i32
    return %c0_i32, %c0_i32_0 : i32, i32
  }
  func.func @transform_5(%arg0: i32) -> (i32, i32) {
    %c0_i32 = arith.constant 0 : i32
    %c0_i32_0 = arith.constant 0 : i32
    %c0_i32_1 = arith.constant 0 : i32
    return %c0_i32, %c0_i32_0 : i32, i32
  }
  func.func @transform_6(%arg0: i32) -> (i32, i32) {
    %c0_i32 = arith.constant 0 : i32
    %c0_i32_0 = arith.constant 0 : i32
    return %arg0, %c0_i32 : i32, i32
  }
  func.func @transform_7(%arg0: i32) -> (i32, i32) {
    %c0_i32 = arith.constant 0 : i32
    %c0_i32_0 = arith.constant 0 : i32
    return %arg0, %c0_i32 : i32, i32
  }
  func.func @transform_8(%arg0: i32) -> (i32, i32) {
    %c0_i32 = arith.constant 0 : i32
    %c0_i32_0 = arith.constant 0 : i32
    return %arg0, %c0_i32 : i32, i32
  }
}

</mosaic_0001>

<llo_original>
// kernel: tpu_custom_call.1
$region0: #{tpu_custom_call.1}
  #allocation0 [shape = 'u32[]', space=smem, size = 0x4, offset = 0x4, fixed_abs, tag = 'smem constant byte address 0x4 - core index']
  #allocation1 [shape = 'u32[144,128]{1,0:T(1,128)}', space=vmem, size = 0x12000, scoped, tag = 'internal scratch']
  %s0 = inlined_call_operand.vmem [shape: f32[6,32], index: 0, kind: input, shape index: {}]
  %s1 = inlined_call_operand.vmem [shape: f32[64,32], index: 1, kind: input, shape index: {}]
  %s2 = inlined_call_operand.vmem [shape: f32[64,32], index: 2, kind: input, shape index: {}]
  %s3 = inlined_call_operand.vmem [shape: f32[4,32], index: 3, kind: input, shape index: {}]
  %s4 = inlined_call_operand.vmem [shape: f32[32,2], index: 4, kind: input, shape index: {}]
  %s5 = inlined_call_operand.vmem [shape: f32[6,32], index: 5, kind: input, shape index: {}]
  %s6 = inlined_call_operand.vmem [shape: f32[64,6], index: 6, kind: input, shape index: {}]
  %s7 = inlined_call_operand.vmem [shape: f32[64,4], index: 7, kind: input, shape index: {}]
  %s8 = inlined_call_operand.vmem [shape: f32[64,2], index: 8, kind: output, shape index: {}]
  %s9 = sld [smem:[#allocation0]]
  $region42: #{tpu_custom_call.1} parent=0
    _
  %s11 = ssub.s32 1, %s9
  %s12 = scalar_select 0, %s11, %s9
  // Predicated region
  $region2: #{tpu_custom_call.1} parent=0 // pred_check
    _
  $region3: #{tpu_custom_call.1} parent=0 // pred_check_branch
    %14 = sbr.rel (0) target = $region5
  $region4: #{tpu_custom_call.1} parent=0 // pred_region
    _
  $region5: #{tpu_custom_call.1} parent=0 // pred_fallthru
    _
  // Predicated region
  $region6: #{tpu_custom_call.1} parent=0 // pred_check
    _
  $region7: #{tpu_custom_call.1} parent=0 // pred_check_branch
    %16 = sbr.rel (0) target = $region9
  $region8: #{tpu_custom_call.1} parent=0 // pred_region
    _
  $region9: #{tpu_custom_call.1} parent=0 // pred_fallthru
    _
  // Predicated region
  $region10: #{tpu_custom_call.1} parent=0 // pred_check
    _
  $region11: #{tpu_custom_call.1} parent=0 // pred_check_branch
    %18 = sbr.rel (0) target = $region13
  $region12: #{tpu_custom_call.1} parent=0 // pred_region
    _
  $region13: #{tpu_custom_call.1} parent=0 // pred_fallthru
    _
  // Predicated region
  $region14: #{tpu_custom_call.1} parent=0 // pred_check
    _
  $region15: #{tpu_custom_call.1} parent=0 // pred_check_branch
    %20 = sbr.rel (0) target = $region17
  $region16: #{tpu_custom_call.1} parent=0 // pred_region
    _
  $region17: #{tpu_custom_call.1} parent=0 // pred_fallthru
    _
  // Predicated region
  $region18: #{tpu_custom_call.1} parent=0 // pred_check
    _
  $region19: #{tpu_custom_call.1} parent=0 // pred_check_branch
    %22 = sbr.rel (0) target = $region21
  $region20: #{tpu_custom_call.1} parent=0 // pred_region
    _
  $region21: #{tpu_custom_call.1} parent=0 // pred_fallthru
    _
  // Predicated region
  $region22: #{tpu_custom_call.1} parent=0 // pred_check
    _
  $region23: #{tpu_custom_call.1} parent=0 // pred_check_branch
    %24 = sbr.rel (0) target = $region25
  $region24: #{tpu_custom_call.1} parent=0 // pred_region
    _
  $region25: #{tpu_custom_call.1} parent=0 // pred_fallthru
    _
  // Predicated region
  $region26: #{tpu_custom_call.1} parent=0 // pred_check
    _
  $region27: #{tpu_custom_call.1} parent=0 // pred_check_branch
    %26 = sbr.rel (0) target = $region29
  $region28: #{tpu_custom_call.1} parent=0 // pred_region
    _
  $region29: #{tpu_custom_call.1} parent=0 // pred_fallthru
    _
  // Predicated region
  $region30: #{tpu_custom_call.1} parent=0 // pred_check
    _
  $region31: #{tpu_custom_call.1} parent=0 // pred_check_branch
    %28 = sbr.rel (0) target = $region33
  $region32: #{tpu_custom_call.1} parent=0 // pred_region
    _
  $region33: #{tpu_custom_call.1} parent=0 // pred_fallthru
    _
  %v29 = vld [vmem:[%s5] sm:$0x1]
  %v30 = vld [vmem:[%s5 + $0x1] sm:$0x1]
  %v31 = vld [vmem:[%s5 + $0x2] sm:$0x1]
  %v32 = vld [vmem:[%s5 + $0x3] sm:$0x1]
  %v33 = vld [vmem:[%s5 + $0x4] sm:$0x1]
  %v34 = vld [vmem:[%s5 + $0x5] sm:$0x1]
  %v35 = vld [vmem:[%s6] sm:$0xff]
  %v36 = vld [vmem:[%s6 + $0x8] sm:$0xff]
  %v37 = vld [vmem:[%s6 + $0x10] sm:$0xff]
  %v38 = vld [vmem:[%s6 + $0x18] sm:$0xff]
  %v39 = vld [vmem:[%s6 + $0x20] sm:$0xff]
  %v40 = vld [vmem:[%s6 + $0x28] sm:$0xff]
  %v41 = vld [vmem:[%s6 + $0x30] sm:$0xff]
  %v42 = vld [vmem:[%s6 + $0x38] sm:$0xff]
  %v43 = vld [vmem:[%s7] sm:$0xff]
  %v44 = vld [vmem:[%s7 + $0x8] sm:$0xff]
  %v45 = vld [vmem:[%s7 + $0x10] sm:$0xff]
  %v46 = vld [vmem:[%s7 + $0x18] sm:$0xff]
  %v47 = vld [vmem:[%s7 + $0x20] sm:$0xff]
  %v48 = vld [vmem:[%s7 + $0x28] sm:$0xff]
  %v49 = vld [vmem:[%s7 + $0x30] sm:$0xff]
  %v50 = vld [vmem:[%s7 + $0x38] sm:$0xff]
  %v51 = vld [vmem:[%s0] sm:$0x3f]
  %v52 = vlaneseq
  %v53 = vshrl.u32 %v52, 7
  %v54 = vsub.s32 0, %v53
  %v55 = vrot.slane %v29, %v54
  %vm56 = vcmask 48128
  %v58 = vsel %vm56, %v35, 0
  %v61 = vsel %vm56, %v36, 0
  %v64 = vsel %vm56, %v37, 0
  %v67 = vsel %vm56, %v38, 0
  %v70 = vsel %vm56, %v39, 0
  %v73 = vsel %vm56, %v40, 0
  %v76 = vsel %vm56, %v41, 0
  %v79 = vsel %vm56, %v42, 0
  %vm81 = vcmask 1045504
  %v83 = vsel %vm81, %v51, 0
  %85 = vmatprep.subr.mxu0 0.0
  %86 = vmatpush1.msra.mxu0 0.0
  %87 = vmatprep.subr.mxu0 0.0
  %88 = vmatpush1.msra.mxu0 0.0
  %89 = vmatprep.subr.mxu0 0.0
  %90 = vmatpush1.msra.mxu0 0.0
  %91 = vmatprep.subr.mxu0 0.0
  %92 = vmatpush1.msra.mxu0 0.0
  %93 = vmatprep.subr.mxu0 0.0
  %94 = vmatpush1.msra.mxu0 0.0
  %95 = vmatprep.subr.mxu0 0.0
  %96 = vmatpush1.msra.mxu0 0.0
  %97 = vmatprep.subr.mxu0 0.0
  %98 = vmatpush1.msra.mxu0 0.0
  %99 = vmatprep.subr.mxu0 0.0
  %100 = vmatpush1.msra.mxu0 0.0
  %101 = vmatprep.subr.mxu0 0.0
  %102 = vmatpush1.msra.mxu0 0.0
  %103 = vmatprep.subr.mxu0 0.0
  %104 = vmatpush1.msra.mxu0 0.0
  %105 = vmatprep.subr.mxu0 0.0
  %106 = vmatpush1.msra.mxu0 0.0
  %107 = vmatprep.subr.mxu0 0.0
  %108 = vmatpush1.msra.mxu0 0.0
  %109 = vmatprep.subr.mxu0 0.0
  %110 = vmatpush1.msra.mxu0 0.0
  %111 = vmatprep.subr.mxu0 0.0
  %112 = vmatpush1.msra.mxu0 0.0
  %113 = vmatprep.subr.mxu0 0.0
  %114 = vmatpush1.msra.mxu0 0.0
  %115 = vmatprep.subr.mxu0 0.0
  %116 = vmatpush1.msra.mxu0 %v83
  %117 = vmatprep.subr.mxu0 0.0
  %118 = vmatpush2.msra.mxu0 0.0
  %119 = vmatprep.subr.mxu0 0.0
  %120 = vmatpush2.msra.mxu0 0.0
  %121 = vmatprep.subr.mxu0 0.0
  %122 = vmatpush2.msra.mxu0 0.0
  %123 = vmatprep.subr.mxu0 0.0
  %124 = vmatpush2.msra.mxu0 0.0
  %125 = vmatprep.subr.mxu0 0.0
  %126 = vmatpush2.msra.mxu0 0.0
  %127 = vmatprep.subr.mxu0 0.0
  %128 = vmatpush2.msra.mxu0 0.0
  %129 = vmatprep.subr.mxu0 0.0
  %130 = vmatpush2.msra.mxu0 0.0
  %131 = vmatprep.subr.mxu0 0.0
  %132 = vmatpush2.msra.mxu0 0.0
  %133 = vmatprep.subr.mxu0 0.0
  %134 = vmatpush2.msra.mxu0 0.0
  %135 = vmatprep.subr.mxu0 0.0
  %136 = vmatpush2.msra.mxu0 0.0
  %137 = vmatprep.subr.mxu0 0.0
  %138 = vmatpush2.msra.mxu0 0.0
  %139 = vmatprep.subr.mxu0 0.0
  %140 = vmatpush2.msra.mxu0 0.0
  %141 = vmatprep.subr.mxu0 0.0
  %142 = vmatpush2.msra.mxu0 0.0
  %143 = vmatprep.subr.mxu0 0.0
  %144 = vmatpush2.msra.mxu0 0.0
  %145 = vmatprep.subr.mxu0 0.0
  %146 = vmatpush2.msra.mxu0 0.0
  %147 = vmatprep.subr.mxu0 0.0
  %148 = vmatpush2.msra.mxu0 0.0
  %149 = vmatprep.mubr.f32.mxu0 0.0
  %150 = vmatmul.mubr.f32.gmra.mxu0 %v58
  %v151 = vpop.f32.mrf.mxu0
  %v152 = vadd.f32 %v55, %v151
  %v153 = vpop.f32.mrf.mxu0
  %154 = vmatprep.mubr.f32.mxu0 0.0
  %155 = vmatmul.mubr.f32.gmra.mxu0 %v61
  %v156 = vpop.f32.mrf.mxu0
  %v157 = vadd.f32 %v55, %v156
  %v158 = vpop.f32.mrf.mxu0
  %159 = vmatprep.mubr.f32.mxu0 0.0
  %160 = vmatmul.mubr.f32.gmra.mxu0 %v64
  %v161 = vpop.f32.mrf.mxu0
  %v162 = vadd.f32 %v55, %v161
  %v163 = vpop.f32.mrf.mxu0
  %164 = vmatprep.mubr.f32.mxu0 0.0
  %165 = vmatmul.mubr.f32.gmra.mxu0 %v67
  %v166 = vpop.f32.mrf.mxu0
  %v167 = vadd.f32 %v55, %v166
  %v168 = vpop.f32.mrf.mxu0
  %169 = vmatprep.mubr.f32.mxu0 0.0
  %170 = vmatmul.mubr.f32.gmra.mxu0 %v70
  %v171 = vpop.f32.mrf.mxu0
  %v172 = vadd.f32 %v55, %v171
  %v173 = vpop.f32.mrf.mxu0
  %174 = vmatprep.mubr.f32.mxu0 0.0
  %175 = vmatmul.mubr.f32.gmra.mxu0 %v73
  %v176 = vpop.f32.mrf.mxu0
  %v177 = vadd.f32 %v55, %v176
  %v178 = vpop.f32.mrf.mxu0
  %179 = vmatprep.mubr.f32.mxu0 0.0
  %180 = vmatmul.mubr.f32.gmra.mxu0 %v76
  %v181 = vpop.f32.mrf.mxu0
  %v182 = vadd.f32 %v55, %v181
  %v183 = vpop.f32.mrf.mxu0
  %184 = vmatprep.mubr.f32.mxu0 0.0
  %185 = vmatmul.mubr.f32.gmra.mxu0 %v79
  %v186 = vpop.f32.mrf.mxu0
  %v187 = vadd.f32 %v55, %v186
  %v188 = vpop.f32.mrf.mxu0
  %189 = vdwg.mxu0
  %v190 = vmax.f32 %v152, 0.0
  %v191 = vmax.f32 %v157, 0.0
  %v192 = vmax.f32 %v162, 0.0
  %v193 = vmax.f32 %v167, 0.0
  %v194 = vmax.f32 %v172, 0.0
  %v195 = vmax.f32 %v177, 0.0
  %v196 = vmax.f32 %v182, 0.0
  %v197 = vmax.f32 %v187, 0.0
  %v198 = vld [vmem:[%s1] sm:$0xff]
  %v199 = vld [vmem:[%s1 + $0x8] sm:$0xff]
  %v200 = vld [vmem:[%s1 + $0x10] sm:$0xff]
  %v201 = vld [vmem:[%s1 + $0x18] sm:$0xff]
  %v202 = vlaneseq
  %v203 = vshrl.u32 %v202, 7
  %v204 = vsub.s32 0, %v203
  %v205 = vrot.slane %v30, %v204
  %vm206 = vcmask 261120
  %v208 = vsel %vm206, %v190, 0
  %v211 = vsel %vm206, %v191, 0
  %v214 = vsel %vm206, %v192, 0
  %v217 = vsel %vm206, %v193, 0
  %v220 = vsel %vm206, %v194, 0
  %v223 = vsel %vm206, %v195, 0
  %v226 = vsel %vm206, %v196, 0
  %v229 = vsel %vm206, %v197, 0
  %231 = vmatprep.subr.mxu0 0.0
  %232 = vmatpush1.msra.mxu0 0.0
  %233 = vmatprep.subr.mxu0 0.0
  %234 = vmatpush1.msra.mxu0 0.0
  %235 = vmatprep.subr.mxu0 0.0
  %236 = vmatpush1.msra.mxu0 0.0
  %237 = vmatprep.subr.mxu0 0.0
  %238 = vmatpush1.msra.mxu0 0.0
  %239 = vmatprep.subr.mxu0 0.0
  %240 = vmatpush1.msra.mxu0 0.0
  %241 = vmatprep.subr.mxu0 0.0
  %242 = vmatpush1.msra.mxu0 0.0
  %243 = vmatprep.subr.mxu0 0.0
  %244 = vmatpush1.msra.mxu0 0.0
  %245 = vmatprep.subr.mxu0 0.0
  %246 = vmatpush1.msra.mxu0 0.0
  %247 = vmatprep.subr.mxu0 0.0
  %248 = vmatpush1.msra.mxu0 0.0
  %249 = vmatprep.subr.mxu0 0.0
  %250 = vmatpush1.msra.mxu0 0.0
  %251 = vmatprep.subr.mxu0 0.0
  %252 = vmatpush1.msra.mxu0 0.0
  %253 = vmatprep.subr.mxu0 0.0
  %254 = vmatpush1.msra.mxu0 0.0
  %255 = vmatprep.subr.mxu0 0.0
  %256 = vmatpush1.msra.mxu0 %v201
  %257 = vmatprep.subr.mxu0 0.0
  %258 = vmatpush1.msra.mxu0 %v200
  %259 = vmatprep.subr.mxu0 0.0
  %260 = vmatpush1.msra.mxu0 %v199
  %261 = vmatprep.subr.mxu0 0.0
  %262 = vmatpush1.msra.mxu0 %v198
  %263 = vmatprep.subr.mxu0 0.0
  %264 = vmatpush2.msra.mxu0 0.0
  %265 = vmatprep.subr.mxu0 0.0
  %266 = vmatpush2.msra.mxu0 0.0
  %267 = vmatprep.subr.mxu0 0.0
  %268 = vmatpush2.msra.mxu0 0.0
  %269 = vmatprep.subr.mxu0 0.0
  %270 = vmatpush2.msra.mxu0 0.0
  %271 = vmatprep.subr.mxu0 0.0
  %272 = vmatpush2.msra.mxu0 0.0
  %273 = vmatprep.subr.mxu0 0.0
  %274 = vmatpush2.msra.mxu0 0.0
  %275 = vmatprep.subr.mxu0 0.0
  %276 = vmatpush2.msra.mxu0 0.0
  %277 = vmatprep.subr.mxu0 0.0
  %278 = vmatpush2.msra.mxu0 0.0
  %279 = vmatprep.subr.mxu0 0.0
  %280 = vmatpush2.msra.mxu0 0.0
  %281 = vmatprep.subr.mxu0 0.0
  %282 = vmatpush2.msra.mxu0 0.0
  %283 = vmatprep.subr.mxu0 0.0
  %284 = vmatpush2.msra.mxu0 0.0
  %285 = vmatprep.subr.mxu0 0.0
  %286 = vmatpush2.msra.mxu0 0.0
  %287 = vmatprep.subr.mxu0 0.0
  %288 = vmatpush2.msra.mxu0 0.0
  %289 = vmatprep.subr.mxu0 0.0
  %290 = vmatpush2.msra.mxu0 0.0
  %291 = vmatprep.subr.mxu0 0.0
  %292 = vmatpush2.msra.mxu0 0.0
  %293 = vmatprep.subr.mxu0 0.0
  %294 = vmatpush2.msra.mxu0 0.0
  %295 = vmatprep.mubr.f32.mxu0 0.0
  %296 = vmatmul.mubr.f32.gmra.mxu0 %v208
  %v297 = vpop.f32.mrf.mxu0
  %v298 = vadd.f32 %v205, %v297
  %v299 = vpop.f32.mrf.mxu0
  %300 = vmatprep.mubr.f32.mxu0 0.0
  %301 = vmatmul.mubr.f32.gmra.mxu0 %v211
  %v302 = vpop.f32.mrf.mxu0
  %v303 = vadd.f32 %v205, %v302
  %v304 = vpop.f32.mrf.mxu0
  %305 = vmatprep.mubr.f32.mxu0 0.0
  %306 = vmatmul.mubr.f32.gmra.mxu0 %v214
  %v307 = vpop.f32.mrf.mxu0
  %v308 = vadd.f32 %v205, %v307
  %v309 = vpop.f32.mrf.mxu0
  %310 = vmatprep.mubr.f32.mxu0 0.0
  %311 = vmatmul.mubr.f32.gmra.mxu0 %v217
  %v312 = vpop.f32.mrf.mxu0
  %v313 = vadd.f32 %v205, %v312
  %v314 = vpop.f32.mrf.mxu0
  %315 = vmatprep.mubr.f32.mxu0 0.0
  %316 = vmatmul.mubr.f32.gmra.mxu0 %v220
  %v317 = vpop.f32.mrf.mxu0
  %v318 = vadd.f32 %v205, %v317
  %v319 = vpop.f32.mrf.mxu0
  %320 = vmatprep.mubr.f32.mxu0 0.0
  %321 = vmatmul.mubr.f32.gmra.mxu0 %v223
  %v322 = vpop.f32.mrf.mxu0
  %v323 = vadd.f32 %v205, %v322
  %v324 = vpop.f32.mrf.mxu0
  %325 = vmatprep.mubr.f32.mxu0 0.0
  %326 = vmatmul.mubr.f32.gmra.mxu0 %v226
  %v327 = vpop.f32.mrf.mxu0
  %v328 = vadd.f32 %v205, %v327
  %v329 = vpop.f32.mrf.mxu0
  %330 = vmatprep.mubr.f32.mxu0 0.0
  %331 = vmatmul.mubr.f32.gmra.mxu0 %v229
  %v332 = vpop.f32.mrf.mxu0
  %v333 = vadd.f32 %v205, %v332
  %v334 = vpop.f32.mrf.mxu0
  %335 = vdwg.mxu0
  %v336 = vlaneseq
  %v337 = vshrl.u32 %v336, 7
  %v338 = vlaneseq
  %v339 = vand.u32 %v338, 127
  %v340 = vmul.u32 %v337, 8
  %vm341 = vcmp.ge.s32.totalorder %v339, %v340
  %v342 = vadd.s32 %v337, 1
  %v343 = vmul.u32 %v342, 8
  %vm344 = vcmp.lt.s32.totalorder %v339, %v343
  %vm345 = vmand %vm341, %vm344
  %v346 = vsel %vm345, 0.125, 0.0
  %vm347 = vcmask 523264
  %v349 = vsel %vm347, %v346, 0
  %351 = vmatprep.subr.mxu0 0.0
  %352 = vmatpush1.msra.mxu0 0.0
  %353 = vmatprep.subr.mxu0 0.0
  %354 = vmatpush1.msra.mxu0 0.0
  %355 = vmatprep.subr.mxu0 0.0
  %356 = vmatpush1.msra.mxu0 0.0
  %357 = vmatprep.subr.mxu0 0.0
  %358 = vmatpush1.msra.mxu0 0.0
  %359 = vmatprep.subr.mxu0 0.0
  %360 = vmatpush1.msra.mxu0 0.0
  %361 = vmatprep.subr.mxu0 0.0
  %362 = vmatpush1.msra.mxu0 0.0
  %363 = vmatprep.subr.mxu0 0.0
  %364 = vmatpush1.msra.mxu0 0.0
  %365 = vmatprep.subr.mxu0 0.0
  %366 = vmatpush1.msra.mxu0 0.0
  %367 = vmatprep.subr.mxu0 0.0
  %368 = vmatpush1.msra.mxu0 %v333
  %369 = vmatprep.subr.mxu0 0.0
  %370 = vmatpush1.msra.mxu0 %v328
  %371 = vmatprep.subr.mxu0 0.0
  %372 = vmatpush1.msra.mxu0 %v323
  %373 = vmatprep.subr.mxu0 0.0
  %374 = vmatpush1.msra.mxu0 %v318
  %375 = vmatprep.subr.mxu0 0.0
  %376 = vmatpush1.msra.mxu0 %v313
  %377 = vmatprep.subr.mxu0 0.0
  %378 = vmatpush1.msra.mxu0 %v308
  %379 = vmatprep.subr.mxu0 0.0
  %380 = vmatpush1.msra.mxu0 %v303
  %381 = vmatprep.subr.mxu0 0.0
  %382 = vmatpush1.msra.mxu0 %v298
  %383 = vmatprep.subr.mxu0 0.0
  %384 = vmatpush2.msra.mxu0 0.0
  %385 = vmatprep.subr.mxu0 0.0
  %386 = vmatpush2.msra.mxu0 0.0
  %387 = vmatprep.subr.mxu0 0.0
  %388 = vmatpush2.msra.mxu0 0.0
  %389 = vmatprep.subr.mxu0 0.0
  %390 = vmatpush2.msra.mxu0 0.0
  %391 = vmatprep.subr.mxu0 0.0
  %392 = vmatpush2.msra.mxu0 0.0
  %393 = vmatprep.subr.mxu0 0.0
  %394 = vmatpush2.msra.mxu0 0.0
  %395 = vmatprep.subr.mxu0 0.0
  %396 = vmatpush2.msra.mxu0 0.0
  %397 = vmatprep.subr.mxu0 0.0
  %398 = vmatpush2.msra.mxu0 0.0
  %399 = vmatprep.subr.mxu0 0.0
  %400 = vmatpush2.msra.mxu0 0.0
  %401 = vmatprep.subr.mxu0 0.0
  %402 = vmatpush2.msra.mxu0 0.0
  %403 = vmatprep.subr.mxu0 0.0
  %404 = vmatpush2.msra.mxu0 0.0
  %405 = vmatprep.subr.mxu0 0.0
  %406 = vmatpush2.msra.mxu0 0.0
  %407 = vmatprep.subr.mxu0 0.0
  %408 = vmatpush2.msra.mxu0 0.0
  %409 = vmatprep.subr.mxu0 0.0
  %410 = vmatpush2.msra.mxu0 0.0
  %411 = vmatprep.subr.mxu0 0.0
  %412 = vmatpush2.msra.mxu0 0.0
  %413 = vmatprep.subr.mxu0 0.0
  %414 = vmatpush2.msra.mxu0 0.0
  %415 = vmatprep.mubr.f32.mxu0 0.0
  %416 = vmatmul.mubr.f32.gmra.mxu0 %v349
  %v417 = vpop.f32.mrf.mxu0
  %v418 = vadd.f32 0.0, %v417
  %v419 = vpop.f32.mrf.mxu0
  %420 = vdwg.mxu0
  %v421 = vld [vmem:[%s2] sm:$0xff]
  %v422 = vld [vmem:[%s2 + $0x8] sm:$0xff]
  %v423 = vld [vmem:[%s2 + $0x10] sm:$0xff]
  %v424 = vld [vmem:[%s2 + $0x18] sm:$0xff]
  %v425 = vlaneseq
  %v426 = vshrl.u32 %v425, 7
  %v427 = vsub.s32 0, %v426
  %v428 = vrot.slane %v31, %v427
  %v430 = vsel %vm206, %v418, 0
  %432 = vmatprep.subr.mxu0 0.0
  %433 = vmatpush1.msra.mxu0 0.0
  %434 = vmatprep.subr.mxu0 0.0
  %435 = vmatpush1.msra.mxu0 0.0
  %436 = vmatprep.subr.mxu0 0.0
  %437 = vmatpush1.msra.mxu0 0.0
  %438 = vmatprep.subr.mxu0 0.0
  %439 = vmatpush1.msra.mxu0 0.0
  %440 = vmatprep.subr.mxu0 0.0
  %441 = vmatpush1.msra.mxu0 0.0
  %442 = vmatprep.subr.mxu0 0.0
  %443 = vmatpush1.msra.mxu0 0.0
  %444 = vmatprep.subr.mxu0 0.0
  %445 = vmatpush1.msra.mxu0 0.0
  %446 = vmatprep.subr.mxu0 0.0
  %447 = vmatpush1.msra.mxu0 0.0
  %448 = vmatprep.subr.mxu0 0.0
  %449 = vmatpush1.msra.mxu0 0.0
  %450 = vmatprep.subr.mxu0 0.0
  %451 = vmatpush1.msra.mxu0 0.0
  %452 = vmatprep.subr.mxu0 0.0
  %453 = vmatpush1.msra.mxu0 0.0
  %454 = vmatprep.subr.mxu0 0.0
  %455 = vmatpush1.msra.mxu0 0.0
  %456 = vmatprep.subr.mxu0 0.0
  %457 = vmatpush1.msra.mxu0 %v424
  %458 = vmatprep.subr.mxu0 0.0
  %459 = vmatpush1.msra.mxu0 %v423
  %460 = vmatprep.subr.mxu0 0.0
  %461 = vmatpush1.msra.mxu0 %v422
  %462 = vmatprep.subr.mxu0 0.0
  %463 = vmatpush1.msra.mxu0 %v421
  %464 = vmatprep.subr.mxu0 0.0
  %465 = vmatpush2.msra.mxu0 0.0
  %466 = vmatprep.subr.mxu0 0.0
  %467 = vmatpush2.msra.mxu0 0.0
  %468 = vmatprep.subr.mxu0 0.0
  %469 = vmatpush2.msra.mxu0 0.0
  %470 = vmatprep.subr.mxu0 0.0
  %471 = vmatpush2.msra.mxu0 0.0
  %472 = vmatprep.subr.mxu0 0.0
  %473 = vmatpush2.msra.mxu0 0.0
  %474 = vmatprep.subr.mxu0 0.0
  %475 = vmatpush2.msra.mxu0 0.0
  %476 = vmatprep.subr.mxu0 0.0
  %477 = vmatpush2.msra.mxu0 0.0
  %478 = vmatprep.subr.mxu0 0.0
  %479 = vmatpush2.msra.mxu0 0.0
  %480 = vmatprep.subr.mxu0 0.0
  %481 = vmatpush2.msra.mxu0 0.0
  %482 = vmatprep.subr.mxu0 0.0
  %483 = vmatpush2.msra.mxu0 0.0
  %484 = vmatprep.subr.mxu0 0.0
  %485 = vmatpush2.msra.mxu0 0.0
  %486 = vmatprep.subr.mxu0 0.0
  %487 = vmatpush2.msra.mxu0 0.0
  %488 = vmatprep.subr.mxu0 0.0
  %489 = vmatpush2.msra.mxu0 0.0
  %490 = vmatprep.subr.mxu0 0.0
  %491 = vmatpush2.msra.mxu0 0.0
  %492 = vmatprep.subr.mxu0 0.0
  %493 = vmatpush2.msra.mxu0 0.0
  %494 = vmatprep.subr.mxu0 0.0
  %495 = vmatpush2.msra.mxu0 0.0
  %496 = vmatprep.mubr.f32.mxu0 0.0
  %497 = vmatmul.mubr.f32.gmra.mxu0 %v430
  %v498 = vpop.f32.mrf.mxu0
  %v499 = vadd.f32 %v428, %v498
  %v500 = vpop.f32.mrf.mxu0
  %501 = vdwg.mxu0
  %v502 = vmax.f32 %v499, 0.0
  %v503 = vld [vmem:[%s1 + $0x20] sm:$0xff]
  %v504 = vld [vmem:[%s1 + $0x28] sm:$0xff]
  %v505 = vld [vmem:[%s1 + $0x30] sm:$0xff]
  %v506 = vld [vmem:[%s1 + $0x38] sm:$0xff]
  %v507 = vlaneseq
  %v508 = vshrl.u32 %v507, 7
  %v509 = vsub.s32 0, %v508
  %v510 = vrot.slane %v32, %v509
  %v512 = vsel %vm206, %v502, 0
  %514 = vmatprep.subr.mxu0 0.0
  %515 = vmatpush1.msra.mxu0 0.0
  %516 = vmatprep.subr.mxu0 0.0
  %517 = vmatpush1.msra.mxu0 0.0
  %518 = vmatprep.subr.mxu0 0.0
  %519 = vmatpush1.msra.mxu0 0.0
  %520 = vmatprep.subr.mxu0 0.0
  %521 = vmatpush1.msra.mxu0 0.0
  %522 = vmatprep.subr.mxu0 0.0
  %523 = vmatpush1.msra.mxu0 0.0
  %524 = vmatprep.subr.mxu0 0.0
  %525 = vmatpush1.msra.mxu0 0.0
  %526 = vmatprep.subr.mxu0 0.0
  %527 = vmatpush1.msra.mxu0 0.0
  %528 = vmatprep.subr.mxu0 0.0
  %529 = vmatpush1.msra.mxu0 0.0
  %530 = vmatprep.subr.mxu0 0.0
  %531 = vmatpush1.msra.mxu0 0.0
  %532 = vmatprep.subr.mxu0 0.0
  %533 = vmatpush1.msra.mxu0 0.0
  %534 = vmatprep.subr.mxu0 0.0
  %535 = vmatpush1.msra.mxu0 0.0
  %536 = vmatprep.subr.mxu0 0.0
  %537 = vmatpush1.msra.mxu0 0.0
  %538 = vmatprep.subr.mxu0 0.0
  %539 = vmatpush1.msra.mxu0 %v506
  %540 = vmatprep.subr.mxu0 0.0
  %541 = vmatpush1.msra.mxu0 %v505
  %542 = vmatprep.subr.mxu0 0.0
  %543 = vmatpush1.msra.mxu0 %v504
  %544 = vmatprep.subr.mxu0 0.0
  %545 = vmatpush1.msra.mxu0 %v503
  %546 = vmatprep.subr.mxu0 0.0
  %547 = vmatpush2.msra.mxu0 0.0
  %548 = vmatprep.subr.mxu0 0.0
  %549 = vmatpush2.msra.mxu0 0.0
  %550 = vmatprep.subr.mxu0 0.0
  %551 = vmatpush2.msra.mxu0 0.0
  %552 = vmatprep.subr.mxu0 0.0
  %553 = vmatpush2.msra.mxu0 0.0
  %554 = vmatprep.subr.mxu0 0.0
  %555 = vmatpush2.msra.mxu0 0.0
  %556 = vmatprep.subr.mxu0 0.0
  %557 = vmatpush2.msra.mxu0 0.0
  %558 = vmatprep.subr.mxu0 0.0
  %559 = vmatpush2.msra.mxu0 0.0
  %560 = vmatprep.subr.mxu0 0.0
  %561 = vmatpush2.msra.mxu0 0.0
  %562 = vmatprep.subr.mxu0 0.0
  %563 = vmatpush2.msra.mxu0 0.0
  %564 = vmatprep.subr.mxu0 0.0
  %565 = vmatpush2.msra.mxu0 0.0
  %566 = vmatprep.subr.mxu0 0.0
  %567 = vmatpush2.msra.mxu0 0.0
  %568 = vmatprep.subr.mxu0 0.0
  %569 = vmatpush2.msra.mxu0 0.0
  %570 = vmatprep.subr.mxu0 0.0
  %571 = vmatpush2.msra.mxu0 0.0
  %572 = vmatprep.subr.mxu0 0.0
  %573 = vmatpush2.msra.mxu0 0.0
  %574 = vmatprep.subr.mxu0 0.0
  %575 = vmatpush2.msra.mxu0 0.0
  %576 = vmatprep.subr.mxu0 0.0
  %577 = vmatpush2.msra.mxu0 0.0
  %578 = vmatprep.mubr.f32.mxu0 0.0
  %579 = vmatmul.mubr.f32.gmra.mxu0 %v512
  %v580 = vpop.f32.mrf.mxu0
  %v581 = vadd.f32 %v510, %v580
  %v582 = vpop.f32.mrf.mxu0
  %583 = vdwg.mxu0
  %v584 = vld [vmem:[%s2 + $0x20] sm:$0xff]
  %v585 = vld [vmem:[%s2 + $0x28] sm:$0xff]
  %v586 = vld [vmem:[%s2 + $0x30] sm:$0xff]
  %v587 = vld [vmem:[%s2 + $0x38] sm:$0xff]
  %v589 = vsel %vm206, %v581, 0
  %591 = vmatprep.subr.mxu0 0.0
  %592 = vmatpush1.msra.mxu0 0.0
  %593 = vmatprep.subr.mxu0 0.0
  %594 = vmatpush1.msra.mxu0 0.0
  %595 = vmatprep.subr.mxu0 0.0
  %596 = vmatpush1.msra.mxu0 0.0
  %597 = vmatprep.subr.mxu0 0.0
  %598 = vmatpush1.msra.mxu0 0.0
  %599 = vmatprep.subr.mxu0 0.0
  %600 = vmatpush1.msra.mxu0 0.0
  %601 = vmatprep.subr.mxu0 0.0
  %602 = vmatpush1.msra.mxu0 0.0
  %603 = vmatprep.subr.mxu0 0.0
  %604 = vmatpush1.msra.mxu0 0.0
  %605 = vmatprep.subr.mxu0 0.0
  %606 = vmatpush1.msra.mxu0 0.0
  %607 = vmatprep.subr.mxu0 0.0
  %608 = vmatpush1.msra.mxu0 0.0
  %609 = vmatprep.subr.mxu0 0.0
  %610 = vmatpush1.msra.mxu0 0.0
  %611 = vmatprep.subr.mxu0 0.0
  %612 = vmatpush1.msra.mxu0 0.0
  %613 = vmatprep.subr.mxu0 0.0
  %614 = vmatpush1.msra.mxu0 0.0
  %615 = vmatprep.subr.mxu0 0.0
  %616 = vmatpush1.msra.mxu0 %v587
  %617 = vmatprep.subr.mxu0 0.0
  %618 = vmatpush1.msra.mxu0 %v586
  %619 = vmatprep.subr.mxu0 0.0
  %620 = vmatpush1.msra.mxu0 %v585
  %621 = vmatprep.subr.mxu0 0.0
  %622 = vmatpush1.msra.mxu0 %v584
  %623 = vmatprep.subr.mxu0 0.0
  %624 = vmatpush2.msra.mxu0 0.0
  %625 = vmatprep.subr.mxu0 0.0
  %626 = vmatpush2.msra.mxu0 0.0
  %627 = vmatprep.subr.mxu0 0.0
  %628 = vmatpush2.msra.mxu0 0.0
  %629 = vmatprep.subr.mxu0 0.0
  %630 = vmatpush2.msra.mxu0 0.0
  %631 = vmatprep.subr.mxu0 0.0
  %632 = vmatpush2.msra.mxu0 0.0
  %633 = vmatprep.subr.mxu0 0.0
  %634 = vmatpush2.msra.mxu0 0.0
  %635 = vmatprep.subr.mxu0 0.0
  %636 = vmatpush2.msra.mxu0 0.0
  %637 = vmatprep.subr.mxu0 0.0
  %638 = vmatpush2.msra.mxu0 0.0
  %639 = vmatprep.subr.mxu0 0.0
  %640 = vmatpush2.msra.mxu0 0.0
  %641 = vmatprep.subr.mxu0 0.0
  %642 = vmatpush2.msra.mxu0 0.0
  %643 = vmatprep.subr.mxu0 0.0
  %644 = vmatpush2.msra.mxu0 0.0
  %645 = vmatprep.subr.mxu0 0.0
  %646 = vmatpush2.msra.mxu0 0.0
  %647 = vmatprep.subr.mxu0 0.0
  %648 = vmatpush2.msra.mxu0 0.0
  %649 = vmatprep.subr.mxu0 0.0
  %650 = vmatpush2.msra.mxu0 0.0
  %651 = vmatprep.subr.mxu0 0.0
  %652 = vmatpush2.msra.mxu0 0.0
  %653 = vmatprep.subr.mxu0 0.0
  %654 = vmatpush2.msra.mxu0 0.0
  %655 = vmatprep.mubr.f32.mxu0 0.0
  %656 = vmatmul.mubr.f32.gmra.mxu0 %v589
  %v657 = vpop.f32.mrf.mxu0
  %v658 = vadd.f32 0.0, %v657
  %v659 = vpop.f32.mrf.mxu0
  %660 = vdwg.mxu0
  %v661 = vadd.s32 %v337, 8
  %v662 = vadd.s32 %v337, 16
  %v663 = vadd.s32 %v337, 24
  %v664 = vadd.s32 %v337, 32
  %v665 = vadd.s32 %v337, 40
  %v666 = vadd.s32 %v337, 48
  %v667 = vadd.s32 %v337, 56
  %v668 = vmul.u32 %v339, 8
  %vm669 = vcmp.ge.s32.totalorder %v337, %v668
  %vm670 = vcmp.ge.s32.totalorder %v661, %v668
  %vm671 = vcmp.ge.s32.totalorder %v662, %v668
  %vm672 = vcmp.ge.s32.totalorder %v663, %v668
  %vm673 = vcmp.ge.s32.totalorder %v664, %v668
  %vm674 = vcmp.ge.s32.totalorder %v665, %v668
  %vm675 = vcmp.ge.s32.totalorder %v666, %v668
  %vm676 = vcmp.ge.s32.totalorder %v667, %v668
  %v677 = vadd.s32 %v339, 1
  %v678 = vmul.u32 %v677, 8
  %vm679 = vcmp.lt.s32.totalorder %v337, %v678
  %vm680 = vcmp.lt.s32.totalorder %v661, %v678
  %vm681 = vcmp.lt.s32.totalorder %v662, %v678
  %vm682 = vcmp.lt.s32.totalorder %v663, %v678
  %vm683 = vcmp.lt.s32.totalorder %v664, %v678
  %vm684 = vcmp.lt.s32.totalorder %v665, %v678
  %vm685 = vcmp.lt.s32.totalorder %v666, %v678
  %vm686 = vcmp.lt.s32.totalorder %v667, %v678
  %vm687 = vmand %vm669, %vm679
  %vm688 = vmand %vm670, %vm680
  %vm689 = vmand %vm671, %vm681
  %vm690 = vmand %vm672, %vm682
  %vm691 = vmand %vm673, %vm683
  %vm692 = vmand %vm674, %vm684
  %vm693 = vmand %vm675, %vm685
  %vm694 = vmand %vm676, %vm686
  %v695 = vsel %vm687, 1.0, 0.0
  %v696 = vsel %vm688, 1.0, 0.0
  %v697 = vsel %vm689, 1.0, 0.0
  %v698 = vsel %vm690, 1.0, 0.0
  %v699 = vsel %vm691, 1.0, 0.0
  %v700 = vsel %vm692, 1.0, 0.0
  %v701 = vsel %vm693, 1.0, 0.0
  %v702 = vsel %vm694, 1.0, 0.0
  %v703 = vld [vmem:[%s3] sm:$0xf]
  %v704 = vlaneseq
  %v705 = vshrl.u32 %v704, 7
  %v706 = vsub.s32 0, %v705
  %v707 = vrot.slane %v33, %v706
  %vm708 = vcmask 31744
  %v710 = vsel %vm708, %v43, 0
  %v713 = vsel %vm708, %v44, 0
  %v716 = vsel %vm708, %v45, 0
  %v719 = vsel %vm708, %v46, 0
  %v722 = vsel %vm708, %v47, 0
  %v725 = vsel %vm708, %v48, 0
  %v728 = vsel %vm708, %v49, 0
  %v731 = vsel %vm708, %v50, 0
  %vm733 = vcmask 1043456
  %v735 = vsel %vm733, %v703, 0
  %737 = vmatprep.subr.mxu0 0.0
  %738 = vmatpush1.msra.mxu0 0.0
  %739 = vmatprep.subr.mxu0 0.0
  %740 = vmatpush1.msra.mxu0 0.0
  %741 = vmatprep.subr.mxu0 0.0
  %742 = vmatpush1.msra.mxu0 0.0
  %743 = vmatprep.subr.mxu0 0.0
  %744 = vmatpush1.msra.mxu0 0.0
  %745 = vmatprep.subr.mxu0 0.0
  %746 = vmatpush1.msra.mxu0 0.0
  %747 = vmatprep.subr.mxu0 0.0
  %748 = vmatpush1.msra.mxu0 0.0
  %749 = vmatprep.subr.mxu0 0.0
  %750 = vmatpush1.msra.mxu0 0.0
  %751 = vmatprep.subr.mxu0 0.0
  %752 = vmatpush1.msra.mxu0 0.0
  %753 = vmatprep.subr.mxu0 0.0
  %754 = vmatpush1.msra.mxu0 0.0
  %755 = vmatprep.subr.mxu0 0.0
  %756 = vmatpush1.msra.mxu0 0.0
  %757 = vmatprep.subr.mxu0 0.0
  %758 = vmatpush1.msra.mxu0 0.0
  %759 = vmatprep.subr.mxu0 0.0
  %760 = vmatpush1.msra.mxu0 0.0
  %761 = vmatprep.subr.mxu0 0.0
  %762 = vmatpush1.msra.mxu0 0.0
  %763 = vmatprep.subr.mxu0 0.0
  %764 = vmatpush1.msra.mxu0 0.0
  %765 = vmatprep.subr.mxu0 0.0
  %766 = vmatpush1.msra.mxu0 0.0
  %767 = vmatprep.subr.mxu0 0.0
  %768 = vmatpush1.msra.mxu0 %v735
  %769 = vmatprep.subr.mxu0 0.0
  %770 = vmatpush2.msra.mxu0 0.0
  %771 = vmatprep.subr.mxu0 0.0
  %772 = vmatpush2.msra.mxu0 0.0
  %773 = vmatprep.subr.mxu0 0.0
  %774 = vmatpush2.msra.mxu0 0.0
  %775 = vmatprep.subr.mxu0 0.0
  %776 = vmatpush2.msra.mxu0 0.0
  %777 = vmatprep.subr.mxu0 0.0
  %778 = vmatpush2.msra.mxu0 0.0
  %779 = vmatprep.subr.mxu0 0.0
  %780 = vmatpush2.msra.mxu0 0.0
  %781 = vmatprep.subr.mxu0 0.0
  %782 = vmatpush2.msra.mxu0 0.0
  %783 = vmatprep.subr.mxu0 0.0
  %784 = vmatpush2.msra.mxu0 0.0
  %785 = vmatprep.subr.mxu0 0.0
  %786 = vmatpush2.msra.mxu0 0.0
  %787 = vmatprep.subr.mxu0 0.0
  %788 = vmatpush2.msra.mxu0 0.0
  %789 = vmatprep.subr.mxu0 0.0
  %790 = vmatpush2.msra.mxu0 0.0
  %791 = vmatprep.subr.mxu0 0.0
  %792 = vmatpush2.msra.mxu0 0.0
  %793 = vmatprep.subr.mxu0 0.0
  %794 = vmatpush2.msra.mxu0 0.0
  %795 = vmatprep.subr.mxu0 0.0
  %796 = vmatpush2.msra.mxu0 0.0
  %797 = vmatprep.subr.mxu0 0.0
  %798 = vmatpush2.msra.mxu0 0.0
  %799 = vmatprep.subr.mxu0 0.0
  %800 = vmatpush2.msra.mxu0 0.0
  %801 = vmatprep.mubr.f32.mxu0 0.0
  %802 = vmatmul.mubr.f32.gmra.mxu0 %v710
  %v803 = vpop.f32.mrf.mxu0
  %v804 = vadd.f32 %v707, %v803
  %v805 = vpop.f32.mrf.mxu0
  %806 = vmatprep.mubr.f32.mxu0 0.0
  %807 = vmatmul.mubr.f32.gmra.mxu0 %v713
  %v808 = vpop.f32.mrf.mxu0
  %v809 = vadd.f32 %v707, %v808
  %v810 = vpop.f32.mrf.mxu0
  %811 = vmatprep.mubr.f32.mxu0 0.0
  %812 = vmatmul.mubr.f32.gmra.mxu0 %v716
  %v813 = vpop.f32.mrf.mxu0
  %v814 = vadd.f32 %v707, %v813
  %v815 = vpop.f32.mrf.mxu0
  %816 = vmatprep.mubr.f32.mxu0 0.0
  %817 = vmatmul.mubr.f32.gmra.mxu0 %v719
  %v818 = vpop.f32.mrf.mxu0
  %v819 = vadd.f32 %v707, %v818
  %v820 = vpop.f32.mrf.mxu0
  %821 = vmatprep.mubr.f32.mxu0 0.0
  %822 = vmatmul.mubr.f32.gmra.mxu0 %v722
  %v823 = vpop.f32.mrf.mxu0
  %v824 = vadd.f32 %v707, %v823
  %v825 = vpop.f32.mrf.mxu0
  %826 = vmatprep.mubr.f32.mxu0 0.0
  %827 = vmatmul.mubr.f32.gmra.mxu0 %v725
  %v828 = vpop.f32.mrf.mxu0
  %v829 = vadd.f32 %v707, %v828
  %v830 = vpop.f32.mrf.mxu0
  %831 = vmatprep.mubr.f32.mxu0 0.0
  %832 = vmatmul.mubr.f32.gmra.mxu0 %v728
  %v833 = vpop.f32.mrf.mxu0
  %v834 = vadd.f32 %v707, %v833
  %v835 = vpop.f32.mrf.mxu0
  %836 = vmatprep.mubr.f32.mxu0 0.0
  %837 = vmatmul.mubr.f32.gmra.mxu0 %v731
  %v838 = vpop.f32.mrf.mxu0
  %v839 = vadd.f32 %v707, %v838
  %v840 = vpop.f32.mrf.mxu0
  %841 = vdwg.mxu0
  %vm842 = vcmask 64512
  %v844 = vsel %vm842, %v695, 0
  %v847 = vsel %vm842, %v696, 0
  %v850 = vsel %vm842, %v697, 0
  %v853 = vsel %vm842, %v698, 0
  %v856 = vsel %vm842, %v699, 0
  %v859 = vsel %vm842, %v700, 0
  %v862 = vsel %vm842, %v701, 0
  %v865 = vsel %vm842, %v702, 0
  %867 = vmatprep.subr.mxu0 0.0
  %868 = vmatpush1.msra.mxu0 0.0
  %869 = vmatprep.subr.mxu0 0.0
  %870 = vmatpush1.msra.mxu0 0.0
  %871 = vmatprep.subr.mxu0 0.0
  %872 = vmatpush1.msra.mxu0 0.0
  %873 = vmatprep.subr.mxu0 0.0
  %874 = vmatpush1.msra.mxu0 0.0
  %875 = vmatprep.subr.mxu0 0.0
  %876 = vmatpush1.msra.mxu0 0.0
  %877 = vmatprep.subr.mxu0 0.0
  %878 = vmatpush1.msra.mxu0 0.0
  %879 = vmatprep.subr.mxu0 0.0
  %880 = vmatpush1.msra.mxu0 0.0
  %881 = vmatprep.subr.mxu0 0.0
  %882 = vmatpush1.msra.mxu0 0.0
  %883 = vmatprep.subr.mxu0 0.0
  %884 = vmatpush1.msra.mxu0 0.0
  %885 = vmatprep.subr.mxu0 0.0
  %886 = vmatpush1.msra.mxu0 0.0
  %887 = vmatprep.subr.mxu0 0.0
  %888 = vmatpush1.msra.mxu0 0.0
  %889 = vmatprep.subr.mxu0 0.0
  %890 = vmatpush1.msra.mxu0 0.0
  %891 = vmatprep.subr.mxu0 0.0
  %892 = vmatpush1.msra.mxu0 0.0
  %893 = vmatprep.subr.mxu0 0.0
  %894 = vmatpush1.msra.mxu0 0.0
  %895 = vmatprep.subr.mxu0 0.0
  %896 = vmatpush1.msra.mxu0 0.0
  %897 = vmatprep.subr.mxu0 0.0
  %898 = vmatpush1.msra.mxu0 %v658
  %899 = vmatprep.subr.mxu0 0.0
  %900 = vmatpush2.msra.mxu0 0.0
  %901 = vmatprep.subr.mxu0 0.0
  %902 = vmatpush2.msra.mxu0 0.0
  %903 = vmatprep.subr.mxu0 0.0
  %904 = vmatpush2.msra.mxu0 0.0
  %905 = vmatprep.subr.mxu0 0.0
  %906 = vmatpush2.msra.mxu0 0.0
  %907 = vmatprep.subr.mxu0 0.0
  %908 = vmatpush2.msra.mxu0 0.0
  %909 = vmatprep.subr.mxu0 0.0
  %910 = vmatpush2.msra.mxu0 0.0
  %911 = vmatprep.subr.mxu0 0.0
  %912 = vmatpush2.msra.mxu0 0.0
  %913 = vmatprep.subr.mxu0 0.0
  %914 = vmatpush2.msra.mxu0 0.0
  %915 = vmatprep.subr.mxu0 0.0
  %916 = vmatpush2.msra.mxu0 0.0
  %917 = vmatprep.subr.mxu0 0.0
  %918 = vmatpush2.msra.mxu0 0.0
  %919 = vmatprep.subr.mxu0 0.0
  %920 = vmatpush2.msra.mxu0 0.0
  %921 = vmatprep.subr.mxu0 0.0
  %922 = vmatpush2.msra.mxu0 0.0
  %923 = vmatprep.subr.mxu0 0.0
  %924 = vmatpush2.msra.mxu0 0.0
  %925 = vmatprep.subr.mxu0 0.0
  %926 = vmatpush2.msra.mxu0 0.0
  %927 = vmatprep.subr.mxu0 0.0
  %928 = vmatpush2.msra.mxu0 0.0
  %929 = vmatprep.subr.mxu0 0.0
  %930 = vmatpush2.msra.mxu0 0.0
  %931 = vmatprep.mubr.f32.mxu0 0.0
  %932 = vmatmul.mubr.f32.gmra.mxu0 %v844
  %v933 = vpop.f32.mrf.mxu0
  %v934 = vadd.f32 0.0, %v933
  %v935 = vpop.f32.mrf.mxu0
  %936 = vmatprep.mubr.f32.mxu0 0.0
  %937 = vmatmul.mubr.f32.gmra.mxu0 %v847
  %v938 = vpop.f32.mrf.mxu0
  %v939 = vadd.f32 0.0, %v938
  %v940 = vpop.f32.mrf.mxu0
  %941 = vmatprep.mubr.f32.mxu0 0.0
  %942 = vmatmul.mubr.f32.gmra.mxu0 %v850
  %v943 = vpop.f32.mrf.mxu0
  %v944 = vadd.f32 0.0, %v943
  %v945 = vpop.f32.mrf.mxu0
  %946 = vmatprep.mubr.f32.mxu0 0.0
  %947 = vmatmul.mubr.f32.gmra.mxu0 %v853
  %v948 = vpop.f32.mrf.mxu0
  %v949 = vadd.f32 0.0, %v948
  %v950 = vpop.f32.mrf.mxu0
  %951 = vmatprep.mubr.f32.mxu0 0.0
  %952 = vmatmul.mubr.f32.gmra.mxu0 %v856
  %v953 = vpop.f32.mrf.mxu0
  %v954 = vadd.f32 0.0, %v953
  %v955 = vpop.f32.mrf.mxu0
  %956 = vmatprep.mubr.f32.mxu0 0.0
  %957 = vmatmul.mubr.f32.gmra.mxu0 %v859
  %v958 = vpop.f32.mrf.mxu0
  %v959 = vadd.f32 0.0, %v958
  %v960 = vpop.f32.mrf.mxu0
  %961 = vmatprep.mubr.f32.mxu0 0.0
  %962 = vmatmul.mubr.f32.gmra.mxu0 %v862
  %v963 = vpop.f32.mrf.mxu0
  %v964 = vadd.f32 0.0, %v963
  %v965 = vpop.f32.mrf.mxu0
  %966 = vmatprep.mubr.f32.mxu0 0.0
  %967 = vmatmul.mubr.f32.gmra.mxu0 %v865
  %v968 = vpop.f32.mrf.mxu0
  %v969 = vadd.f32 0.0, %v968
  %v970 = vpop.f32.mrf.mxu0
  %971 = vdwg.mxu0
  %v972 = vadd.f32 %v804, %v934
  %v973 = vadd.f32 %v809, %v939
  %v974 = vadd.f32 %v814, %v944
  %v975 = vadd.f32 %v819, %v949
  %v976 = vadd.f32 %v824, %v954
  %v977 = vadd.f32 %v829, %v959
  %v978 = vadd.f32 %v834, %v964
  %v979 = vadd.f32 %v839, %v969
  %v980 = vmax.f32 %v972, 0.0
  %v981 = vmax.f32 %v973, 0.0
  %v982 = vmax.f32 %v974, 0.0
  %v983 = vmax.f32 %v975, 0.0
  %v984 = vmax.f32 %v976, 0.0
  %v985 = vmax.f32 %v977, 0.0
  %v986 = vmax.f32 %v978, 0.0
  %v987 = vmax.f32 %v979, 0.0
  %v988 = vld [vmem:[%s4] sm:$0xff]
  %v989 = vld [vmem:[%s4 + $0x8] sm:$0xff]
  %v990 = vld [vmem:[%s4 + $0x10] sm:$0xff]
  %v991 = vld [vmem:[%s4 + $0x18] sm:$0xff]
  %v992 = vlaneseq
  %v993 = vshrl.u32 %v992, 7
  %v994 = vsub.s32 0, %v993
  %v995 = vrot.slane %v34, %v994
  %v997 = vsel %vm206, %v980, 0
  %v1000 = vsel %vm206, %v981, 0
  %v1003 = vsel %vm206, %v982, 0
  %v1006 = vsel %vm206, %v983, 0
  %v1009 = vsel %vm206, %v984, 0
  %v1012 = vsel %vm206, %v985, 0
  %v1015 = vsel %vm206, %v986, 0
  %v1018 = vsel %vm206, %v987, 0
  %1020 = vmatprep.subr.mxu0 0.0
  %1021 = vmatpush1.msra.mxu0 0.0
  %1022 = vmatprep.subr.mxu0 0.0
  %1023 = vmatpush1.msra.mxu0 0.0
  %1024 = vmatprep.subr.mxu0 0.0
  %1025 = vmatpush1.msra.mxu0 0.0
  %1026 = vmatprep.subr.mxu0 0.0
  %1027 = vmatpush1.msra.mxu0 0.0
  %1028 = vmatprep.subr.mxu0 0.0
  %1029 = vmatpush1.msra.mxu0 0.0
  %1030 = vmatprep.subr.mxu0 0.0
  %1031 = vmatpush1.msra.mxu0 0.0
  %1032 = vmatprep.subr.mxu0 0.0
  %1033 = vmatpush1.msra.mxu0 0.0
  %1034 = vmatprep.subr.mxu0 0.0
  %1035 = vmatpush1.msra.mxu0 0.0
  %1036 = vmatprep.subr.mxu0 0.0
  %1037 = vmatpush1.msra.mxu0 0.0
  %1038 = vmatprep.subr.mxu0 0.0
  %1039 = vmatpush1.msra.mxu0 0.0
  %1040 = vmatprep.subr.mxu0 0.0
  %1041 = vmatpush1.msra.mxu0 0.0
  %1042 = vmatprep.subr.mxu0 0.0
  %1043 = vmatpush1.msra.mxu0 0.0
  %1044 = vmatprep.subr.mxu0 0.0
  %1045 = vmatpush1.msra.mxu0 %v991
  %1046 = vmatprep.subr.mxu0 0.0
  %1047 = vmatpush1.msra.mxu0 %v990
  %1048 = vmatprep.subr.mxu0 0.0
  %1049 = vmatpush1.msra.mxu0 %v989
  %1050 = vmatprep.subr.mxu0 0.0
  %1051 = vmatpush1.msra.mxu0 %v988
  %1052 = vmatprep.subr.mxu0 0.0
  %1053 = vmatpush2.msra.mxu0 0.0
  %1054 = vmatprep.subr.mxu0 0.0
  %1055 = vmatpush2.msra.mxu0 0.0
  %1056 = vmatprep.subr.mxu0 0.0
  %1057 = vmatpush2.msra.mxu0 0.0
  %1058 = vmatprep.subr.mxu0 0.0
  %1059 = vmatpush2.msra.mxu0 0.0
  %1060 = vmatprep.subr.mxu0 0.0
  %1061 = vmatpush2.msra.mxu0 0.0
  %1062 = vmatprep.subr.mxu0 0.0
  %1063 = vmatpush2.msra.mxu0 0.0
  %1064 = vmatprep.subr.mxu0 0.0
  %1065 = vmatpush2.msra.mxu0 0.0
  %1066 = vmatprep.subr.mxu0 0.0
  %1067 = vmatpush2.msra.mxu0 0.0
  %1068 = vmatprep.subr.mxu0 0.0
  %1069 = vmatpush2.msra.mxu0 0.0
  %1070 = vmatprep.subr.mxu0 0.0
  %1071 = vmatpush2.msra.mxu0 0.0
  %1072 = vmatprep.subr.mxu0 0.0
  %1073 = vmatpush2.msra.mxu0 0.0
  %1074 = vmatprep.subr.mxu0 0.0
  %1075 = vmatpush2.msra.mxu0 0.0
  %1076 = vmatprep.subr.mxu0 0.0
  %1077 = vmatpush2.msra.mxu0 0.0
  %1078 = vmatprep.subr.mxu0 0.0
  %1079 = vmatpush2.msra.mxu0 0.0
  %1080 = vmatprep.subr.mxu0 0.0
  %1081 = vmatpush2.msra.mxu0 0.0
  %1082 = vmatprep.subr.mxu0 0.0
  %1083 = vmatpush2.msra.mxu0 0.0
  %1084 = vmatprep.mubr.f32.mxu0 0.0
  %1085 = vmatmul.mubr.f32.gmra.mxu0 %v997
  %v1086 = vpop.f32.mrf.mxu0
  %v1087 = vadd.f32 %v995, %v1086
  %v1088 = vpop.f32.mrf.mxu0
  %1089 = vmatprep.mubr.f32.mxu0 0.0
  %1090 = vmatmul.mubr.f32.gmra.mxu0 %v1000
  %v1091 = vpop.f32.mrf.mxu0
  %v1092 = vadd.f32 %v995, %v1091
  %v1093 = vpop.f32.mrf.mxu0
  %1094 = vmatprep.mubr.f32.mxu0 0.0
  %1095 = vmatmul.mubr.f32.gmra.mxu0 %v1003
  %v1096 = vpop.f32.mrf.mxu0
  %v1097 = vadd.f32 %v995, %v1096
  %v1098 = vpop.f32.mrf.mxu0
  %1099 = vmatprep.mubr.f32.mxu0 0.0
  %1100 = vmatmul.mubr.f32.gmra.mxu0 %v1006
  %v1101 = vpop.f32.mrf.mxu0
  %v1102 = vadd.f32 %v995, %v1101
  %v1103 = vpop.f32.mrf.mxu0
  %1104 = vmatprep.mubr.f32.mxu0 0.0
  %1105 = vmatmul.mubr.f32.gmra.mxu0 %v1009
  %v1106 = vpop.f32.mrf.mxu0
  %v1107 = vadd.f32 %v995, %v1106
  %v1108 = vpop.f32.mrf.mxu0
  %1109 = vmatprep.mubr.f32.mxu0 0.0
  %1110 = vmatmul.mubr.f32.gmra.mxu0 %v1012
  %v1111 = vpop.f32.mrf.mxu0
  %v1112 = vadd.f32 %v995, %v1111
  %v1113 = vpop.f32.mrf.mxu0
  %1114 = vmatprep.mubr.f32.mxu0 0.0
  %1115 = vmatmul.mubr.f32.gmra.mxu0 %v1015
  %v1116 = vpop.f32.mrf.mxu0
  %v1117 = vadd.f32 %v995, %v1116
  %v1118 = vpop.f32.mrf.mxu0
  %1119 = vmatprep.mubr.f32.mxu0 0.0
  %1120 = vmatmul.mubr.f32.gmra.mxu0 %v1018
  %v1121 = vpop.f32.mrf.mxu0
  %v1122 = vadd.f32 %v995, %v1121
  %v1123 = vpop.f32.mrf.mxu0
  %1124 = vdwg.mxu0
  %v1125 = vxor.u32 %v1087, 2147483648
  %v1126 = vxor.u32 %v1092, 2147483648
  %v1127 = vxor.u32 %v1097, 2147483648
  %v1128 = vxor.u32 %v1102, 2147483648
  %v1129 = vxor.u32 %v1107, 2147483648
  %v1130 = vxor.u32 %v1112, 2147483648
  %v1131 = vxor.u32 %v1117, 2147483648
  %v1132 = vxor.u32 %v1122, 2147483648
  %v1133 = vmul.f32 %v1125, 1.442695
  %v1134 = vpow.pop %v1133
  %v1135 = vmul.f32 %v1126, 1.442695
  %v1136 = vpow.pop %v1135
  %v1137 = vmul.f32 %v1127, 1.442695
  %v1138 = vpow.pop %v1137
  %v1139 = vmul.f32 %v1128, 1.442695
  %v1140 = vpow.pop %v1139
  %v1141 = vmul.f32 %v1129, 1.442695
  %v1142 = vpow.pop %v1141
  %v1143 = vmul.f32 %v1130, 1.442695
  %v1144 = vpow.pop %v1143
  %v1145 = vmul.f32 %v1131, 1.442695
  %v1146 = vpow.pop %v1145
  %v1147 = vmul.f32 %v1132, 1.442695
  %v1148 = vpow.pop %v1147
  %v1149 = vadd.f32 %v1134, 1.0
  %v1150 = vadd.f32 %v1136, 1.0
  %v1151 = vadd.f32 %v1138, 1.0
  %v1152 = vadd.f32 %v1140, 1.0
  %v1153 = vadd.f32 %v1142, 1.0
  %v1154 = vadd.f32 %v1144, 1.0
  %v1155 = vadd.f32 %v1146, 1.0
  %v1156 = vadd.f32 %v1148, 1.0
  %v1157 = vrcp.pop %v1149
  %v1158 = vmul.f32 1.0, %v1157
  %v1159 = vrcp.pop %v1150
  %v1160 = vmul.f32 1.0, %v1159
  %v1161 = vrcp.pop %v1151
  %v1162 = vmul.f32 1.0, %v1161
  %v1163 = vrcp.pop %v1152
  %v1164 = vmul.f32 1.0, %v1163
  %v1165 = vrcp.pop %v1153
  %v1166 = vmul.f32 1.0, %v1165
  %v1167 = vrcp.pop %v1154
  %v1168 = vmul.f32 1.0, %v1167
  %v1169 = vrcp.pop %v1155
  %v1170 = vmul.f32 1.0, %v1169
  %v1171 = vrcp.pop %v1156
  %v1172 = vmul.f32 1.0, %v1171
  %vm1173 = vcmp.eq.s32.totalorder %v339, 0
  %v1174 = vmul.f32 %v1158, 1.442695
  %v1175 = vpow.pop %v1174
  %v1176 = vmul.f32 %v1160, 1.442695
  %v1177 = vpow.pop %v1176
  %v1178 = vmul.f32 %v1162, 1.442695
  %v1179 = vpow.pop %v1178
  %v1180 = vmul.f32 %v1164, 1.442695
  %v1181 = vpow.pop %v1180
  %v1182 = vmul.f32 %v1166, 1.442695
  %v1183 = vpow.pop %v1182
  %v1184 = vmul.f32 %v1168, 1.442695
  %v1185 = vpow.pop %v1184
  %v1186 = vmul.f32 %v1170, 1.442695
  %v1187 = vpow.pop %v1186
  %v1188 = vmul.f32 %v1172, 1.442695
  %v1189 = vpow.pop %v1188
  %v1190 = vsel %vm1173, %v1158, %v1175
  %v1191 = vsel %vm1173, %v1160, %v1177
  %v1192 = vsel %vm1173, %v1162, %v1179
  %v1193 = vsel %vm1173, %v1164, %v1181
  %v1194 = vsel %vm1173, %v1166, %v1183
  %v1195 = vsel %vm1173, %v1168, %v1185
  %v1196 = vsel %vm1173, %v1170, %v1187
  %v1197 = vsel %vm1173, %v1172, %v1189
  %v1198 = vadd.f32 %v1190, 0.001
  %v1199 = vadd.f32 %v1191, 0.001
  %v1200 = vadd.f32 %v1192, 0.001
  %v1201 = vadd.f32 %v1193, 0.001
  %v1202 = vadd.f32 %v1194, 0.001
  %v1203 = vadd.f32 %v1195, 0.001
  %v1204 = vadd.f32 %v1196, 0.001
  %v1205 = vadd.f32 %v1197, 0.001
  %vm1206 = vcmask 15360
  %1207 = vst.msk [vmem:[%s8] sm:$0xff] %vm1206, %v1198
  %1208 = vst.msk [vmem:[%s8 + $0x8] sm:$0xff] %vm1206, %v1199
  %1209 = vst.msk [vmem:[%s8 + $0x10] sm:$0xff] %vm1206, %v1200
  %1210 = vst.msk [vmem:[%s8 + $0x18] sm:$0xff] %vm1206, %v1201
  %1211 = vst.msk [vmem:[%s8 + $0x20] sm:$0xff] %vm1206, %v1202
  %1212 = vst.msk [vmem:[%s8 + $0x28] sm:$0xff] %vm1206, %v1203
  %1213 = vst.msk [vmem:[%s8 + $0x30] sm:$0xff] %vm1206, %v1204
  %1214 = vst.msk [vmem:[%s8 + $0x38] sm:$0xff] %vm1206, %v1205
  // Predicated region
  $region34: #{tpu_custom_call.1} parent=0 // pred_check
    _
  $region35: #{tpu_custom_call.1} parent=0 // pred_check_branch
    %1216 = sbr.rel (0) target = $region37
  $region36: #{tpu_custom_call.1} parent=0 // pred_region
    _
  $region37: #{tpu_custom_call.1} parent=0 // pred_fallthru
    _
  // Predicated region
  $region38: #{tpu_custom_call.1} parent=0 // pred_check
    _
  $region39: #{tpu_custom_call.1} parent=0 // pred_check_branch
    %1218 = sbr.rel (0) target = $region41
  $region40: #{tpu_custom_call.1} parent=0 // pred_region
    _
  $region41: #{tpu_custom_call.1} parent=0 // pred_fallthru
    _

</llo_original>
